<compile_context>
chip_gen: v7x
topology: tpu7x:2x2x1
jax: 0.10.0
libtpu: 0.0.40
codegen_flags: <defaults>
</compile_context>

<pallas_src>
import jax
import jax.numpy as jnp
from jax.experimental import pallas as pl
from jax.experimental.pallas import tpu as pltpu


def _eltwise_add_kernel(x_ref, y_ref, o_ref):
    # Pure VPU elementwise add on the current lane-dense (tile_rows, lane) tile.
    o_ref[...] = x_ref[...] + y_ref[...]


_LANE = 2048                   # lane-dense last dim (multiple of 128)
_TILE_TARGET_BYTES = 4 << 20   # ~4 MiB per operand tile -> ~24 MiB resident (x3 ops, x2 bufs)
_VMEM_LIMIT_BYTES = 48 << 20   # safe on v5e/v6e (128 MiB phys) and v7x (64 MiB phys)


def _flat_layout(total, itemsize):
    """Pick (lane, tile_rows, padded_rows, num_tiles) for a flattened add."""
    # Lane width: multiple of 128; shrink for tiny inputs to limit padding.
    lane = _LANE
    while lane > 128 and lane > total:
        lane //= 2
    rows = -(-total // lane)

    # Sublane alignment: 8 rows for 32-bit, 16 for bf16, 32 for int8.
    sub = max(8, 32 // itemsize)

    # Largest tile (in rows) under the per-operand byte target, sublane-aligned.
    tile_rows_max = max(sub, (_TILE_TARGET_BYTES // (lane * itemsize)) // sub * sub)

    # Number of tiles: enough to stay under the byte target; keep >= 2 when the
    # data allows it so v7x's two TensorCores both get work.
    num_tiles = -(-rows // tile_rows_max)
    if num_tiles < 2 and rows >= 2 * sub:
        num_tiles = 2

    if num_tiles == 1:
        # Single full-array block: no (8,128) divisibility gate applies.
        return lane, rows, rows, 1

    # Balance rows across tiles (minimizes padding), round up to sublane multiple.
    tile_rows = -(-rows // num_tiles)
    tile_rows = -(-tile_rows // sub) * sub
    padded_rows = num_tiles * tile_rows
    return lane, tile_rows, padded_rows, num_tiles


def eltwise_add(x, y):
    """Forward of EltWiseModule with enable=False: out = x + y (any shape)."""
    assert x.shape == y.shape and x.dtype == y.dtype
    orig_shape = x.shape
    total = x.size
    itemsize = jnp.dtype(x.dtype).itemsize

    lane, tile_rows, padded_rows, num_tiles = _flat_layout(total, itemsize)
    padded_total = padded_rows * lane

    # NCHW (or any layout) -> flat is a contiguous, zero-copy reshape.
    xf = x.reshape(-1)
    yf = y.reshape(-1)
    if padded_total != total:
        pad = padded_total - total
        xf = jnp.pad(xf, (0, pad))
        yf = jnp.pad(yf, (0, pad))
    x2 = xf.reshape(padded_rows, lane)
    y2 = yf.reshape(padded_rows, lane)

    out2 = pl.pallas_call(
        _eltwise_add_kernel,
        out_shape=jax.ShapeDtypeStruct((padded_rows, lane), x.dtype),
        grid_spec=pl.GridSpec(
            grid=(num_tiles,),
            in_specs=[
                pl.BlockSpec((tile_rows, lane), lambda i: (i, 0)),
                pl.BlockSpec((tile_rows, lane), lambda i: (i, 0)),
            ],
            out_specs=pl.BlockSpec((tile_rows, lane), lambda i: (i, 0)),
        ),
        compiler_params=pltpu.CompilerParams(
            dimension_semantics=("parallel",),
            vmem_limit_bytes=_VMEM_LIMIT_BYTES,
        ),
        cost_estimate=pl.CostEstimate(
            flops=total,
            transcendentals=0,
            bytes_accessed=3 * total * itemsize,
        ),
    )(x2, y2)

    out = out2.reshape(-1)
    if padded_total != total:
        out = out[:total]
    return out.reshape(orig_shape)


# TODO(synk): the `enable=True` quantized path (per-channel scale_x/scale_y
# derived from args.global_buffer in coordinate()) depends on a runtime
# quantization buffer and is disabled in the default module state; if ever
# needed it should be fused into _eltwise_add_kernel as a scale-multiply-add
# (the kernel is HBM-bound, so the extra VALU work is free) rather than a
# separate pass.


if __name__ == "__main__":
    key = jax.random.PRNGKey(0)
    kx, ky = jax.random.split(key)

    # Small NCHW shapes consistent with the module's conv-style usage.
    x = jax.random.normal(kx, (2, 4, 16, 16), dtype=jnp.float32)
    y = jax.random.normal(ky, (2, 4, 16, 16), dtype=jnp.float32)

    out = eltwise_add(x, y)
    jax.block_until_ready(out)
    ref = x + y
    assert out.shape == ref.shape and out.dtype == ref.dtype
    assert jnp.allclose(out, ref, atol=1e-6, rtol=1e-6)

    # Second (still small) shape that exercises the multi-tile, lane-dense path.
    kx2, ky2 = jax.random.split(ky)
    x2 = jax.random.normal(kx2, (2, 8, 64, 64), dtype=jnp.float32)
    y2 = jax.random.normal(ky2, (2, 8, 64, 64), dtype=jnp.float32)
    out2 = eltwise_add(x2, y2)
    jax.block_until_ready(out2)
    assert jnp.allclose(out2, x2 + y2, atol=1e-6, rtol=1e-6)

    print("KERNEL_OK")
</pallas_src>

<mosaic_0001>
module attributes {stable_mosaic.version = 11 : i64} {
  func.func @_eltwise_add_kernel(%arg0: i32, %arg1: memref<1x2048xf32, #tpu.memory_space<vmem>>, %arg2: memref<1x2048xf32, #tpu.memory_space<vmem>>, %arg3: memref<1x2048xf32, #tpu.memory_space<vmem>>) attributes {dimension_semantics = [#tpu.dimension_semantics<parallel>], iteration_bounds = array<i64: 1>, scalar_prefetch = 0 : i64, scratch_operands = 0 : i64, tpu.core_type = #tpu.core_type<tc>, window_params = [{transform_indices = @transform_0, window_bounds = array<i64: 1, 2048>}, {transform_indices = @transform_1, window_bounds = array<i64: 1, 2048>}, {transform_indices = @transform_2, window_bounds = array<i64: 1, 2048>}]} {
    %c0 = arith.constant 0 : index
    %c0_0 = arith.constant 0 : index
    %0 = vector.load %arg1[%c0, %c0_0] : memref<1x2048xf32, #tpu.memory_space<vmem>>, vector<1x2048xf32>
    %c0_1 = arith.constant 0 : index
    %c0_2 = arith.constant 0 : index
    %1 = vector.load %arg2[%c0_1, %c0_2] : memref<1x2048xf32, #tpu.memory_space<vmem>>, vector<1x2048xf32>
    %2 = arith.addf %0, %1 : vector<1x2048xf32>
    %c0_3 = arith.constant 0 : index
    %c0_4 = arith.constant 0 : index
    %3 = vector.load %arg3[%c0_3, %c0_4] : memref<1x2048xf32, #tpu.memory_space<vmem>>, vector<1x2048xf32>
    tpu.vector_store %arg3[%c0_3, %c0_4], %2 {strides = array<i32>} : memref<1x2048xf32, #tpu.memory_space<vmem>>, vector<1x2048xf32>,
    return
  }
  func.func @transform_0(%arg0: i32) -> (i32, i32) {
    %c0_i32 = arith.constant 0 : i32
    %c0_i32_0 = arith.constant 0 : i32
    return %arg0, %c0_i32 : i32, i32
  }
  func.func @transform_1(%arg0: i32) -> (i32, i32) {
    %c0_i32 = arith.constant 0 : i32
    %c0_i32_0 = arith.constant 0 : i32
    return %arg0, %c0_i32 : i32, i32
  }
  func.func @transform_2(%arg0: i32) -> (i32, i32) {
    %c0_i32 = arith.constant 0 : i32
    %c0_i32_0 = arith.constant 0 : i32
    return %arg0, %c0_i32 : i32, i32
  }
}

</mosaic_0001>

<llo_original>
// kernel: tpu_custom_call.1
$region0: #{tpu_custom_call.1}
  #allocation0 [shape = 'u32[]', space=smem, size = 0x4, offset = 0x4, fixed_abs, tag = 'smem constant byte address 0x4 - core index']
  #allocation1 [shape = 'u32[144,128]{1,0:T(1,128)}', space=vmem, size = 0x12000, scoped, tag = 'internal scratch']
  %s0 = inlined_call_operand.hbm [shape: f32[1,2048], index: 0, kind: input, shape index: {}]
  %s1 = inlined_call_operand.hbm [shape: f32[1,2048], index: 1, kind: input, shape index: {}]
  %s2 = inlined_call_operand.hbm [shape: f32[1,2048], index: 2, kind: output, shape index: {}]
  %s3 = sld [smem:[#allocation0]]
  $region26: #{tpu_custom_call.1} parent=0
    _
  %s5 = ssub.s32 1, %s3
  %s6 = scalar_select 0, %s5, %s3
  $region1: #{tpu_custom_call.1} parent=0
    #allocation2 [shape = 'u8[8192]{0}', space=vmem, size = 0x2000, scoped, tag = 'input window, operand 0, single buffered']
    #allocation3 [shape = 's32[1]{0}', space=sflag, size = 0x4, scoped, tag = 'scoped memory for tpu_custom_call.1']
    #allocation4 [shape = 's32[1]{0}', space=sflag, size = 0x4, scoped, tag = 'scoped memory for tpu_custom_call.1']
    #allocation5 [shape = 'u8[8192]{0}', space=vmem, size = 0x2000, scoped, tag = 'input window, operand 1, single buffered']
    #allocation6 [shape = 's32[1]{0}', space=sflag, size = 0x4, scoped, tag = 'scoped memory for tpu_custom_call.1']
    #allocation7 [shape = 'u8[8192]{0}', space=vmem, size = 0x2000, scoped, tag = 'output window, operand 0, single buffered']
    %7 = vsyncpa [#allocation3], 0
    %8 = vsyncpa [#allocation6], 0
    %9 = vsyncpa [#allocation4], 0
    // Predicated region
    $region2: #{tpu_custom_call.1} parent=1 // pred_check
      _
    $region3: #{tpu_custom_call.1} parent=1 // pred_check_branch
      %11 = sbr.rel (0) target = $region5
    $region4: #{tpu_custom_call.1} parent=1 // pred_region
      %s13 = ssub.s32 256, 256
      %14 = vsyncadd [#allocation3], %s13
      %s16 = sshll.u32 [#allocation2], 4
      %s17 = int_to_ptr.vmem [resolvable:$true] %s16
      %19 = dma.hbm_to_vmem [thread:$0]  %s0, 256, %s17, [#allocation3]
    $region5: #{tpu_custom_call.1} parent=1 // pred_fallthru
      _
    // Predicated region
    $region6: #{tpu_custom_call.1} parent=1 // pred_check
      _
    $region7: #{tpu_custom_call.1} parent=1 // pred_check_branch
      %21 = sbr.rel (0) target = $region9
    $region8: #{tpu_custom_call.1} parent=1 // pred_region
      %s23 = ssub.s32 256, 256
      %24 = vsyncadd [#allocation6], %s23
      %s26 = sshll.u32 [#allocation5], 4
      %s27 = int_to_ptr.vmem [resolvable:$true] %s26
      %29 = dma.hbm_to_vmem [thread:$0]  %s1, 256, %s27, [#allocation6]
    $region9: #{tpu_custom_call.1} parent=1 // pred_fallthru
      _
    // Predicated region
    $region10: #{tpu_custom_call.1} parent=1 // pred_check
      _
    $region11: #{tpu_custom_call.1} parent=1 // pred_check_branch
      %31 = sbr.rel (0) target = $region13
    $region12: #{tpu_custom_call.1} parent=1 // pred_region
      %32 = dma.done [#allocation3], 256
    $region13: #{tpu_custom_call.1} parent=1 // pred_fallthru
      _
    // Predicated region
    $region14: #{tpu_custom_call.1} parent=1 // pred_check
      _
    $region15: #{tpu_custom_call.1} parent=1 // pred_check_branch
      %34 = sbr.rel (0) target = $region17
    $region16: #{tpu_custom_call.1} parent=1 // pred_region
      %35 = dma.done [#allocation6], 256
    $region17: #{tpu_custom_call.1} parent=1 // pred_fallthru
      _
    %v36 = vld [vmem:[#allocation2] sm:$0xff]
    %v37 = vld [vmem:[#allocation2 + $0x8] sm:$0xff]
    %v38 = vld [vmem:[#allocation5] sm:$0xff]
    %v39 = vld [vmem:[#allocation5 + $0x8] sm:$0xff]
    %v40 = vadd.f32 %v36, %v38
    %v41 = vadd.f32 %v37, %v39
    %42 = vst [vmem:[#allocation7] sm:$0xff] %v40
    %43 = vst [vmem:[#allocation7 + $0x8] sm:$0xff] %v41
    // Predicated region
    $region18: #{tpu_custom_call.1} parent=1 // pred_check
      _
    $region19: #{tpu_custom_call.1} parent=1 // pred_check_branch
      %45 = sbr.rel (0) target = $region21
    $region20: #{tpu_custom_call.1} parent=1 // pred_region
      %s47 = ssub.s32 256, 256
      %48 = vsyncadd [#allocation4], %s47
      %s50 = sshll.u32 [#allocation7], 4
      %s51 = int_to_ptr.vmem [resolvable:$true] %s50
      %53 = dma.vmem_to_hbm [thread:$0]  %s51, 256, %s2, [#allocation4]
    $region21: #{tpu_custom_call.1} parent=1 // pred_fallthru
      _
    // Predicated region
    $region22: #{tpu_custom_call.1} parent=1 // pred_check
      _
    $region23: #{tpu_custom_call.1} parent=1 // pred_check_branch
      %55 = sbr.rel (0) target = $region25
    $region24: #{tpu_custom_call.1} parent=1 // pred_region
      %56 = dma.done [#allocation4], 256
    $region25: #{tpu_custom_call.1} parent=1 // pred_fallthru
      _
    %57 = vsyncpa [#allocation3], 1
    %58 = vsyncpa [#allocation6], 1
    %59 = vsyncpa [#allocation4], 1

</llo_original>
